<compile_context>
chip_gen: v6e
topology: v6e:2x2x1
jax: 0.10.0
libtpu: 0.0.40
codegen_flags: <defaults>
</compile_context>

<pallas_src>
import functools

import jax
import jax.numpy as jnp
from jax import lax
from jax.experimental import pallas as pl
from jax.experimental.pallas import tpu as pltpu


def _hnet_upsample_kernel(x_ref, w_ref, gw_ref, gb_ref, o_ref, patch_ref,
                          *, C_in, C_out, W, K, pad):
    """One batch element per grid step, original-resolution spatial flattened.

    x_ref:     (2, 1, C_in, N + 2*pad_flat)  re/im streams, flat-padded image
    w_ref:     (2*4*C_out, K*K*2*C_in) bf16  polyphase complex conv slab, BN folded
                                             rows = (re/im, phase(py,px), c_out)
                                             cols = (tap(a,b), re/im_in, c_in)
    gw_ref:    (4*C_out, 4*C_out) f32        block-diag ScalarGate 1x1-conv weight
    gb_ref:    (4*C_out, 1)      f32         per-phase-tiled ScalarGate bias
    o_ref:     (1, 2*4*C_out, N)             gated output, rows as in w_ref
    patch_ref: (K*K*2*C_in, N)   f32 VMEM    im2col patch scratch
    """
    n = o_ref.shape[-1]                      # H * W original-resolution positions
    pad_flat = pad * W + pad

    # 'same'-padding border masks built in-kernel.  Only the horizontal dx=+-1
    # taps need masking: vertical out-of-range taps already read zeros from the
    # flat pad, and the dx masks also kill the row-wrap columns of flattening.
    col = lax.broadcasted_iota(jnp.int32, (1, n), 1) % W
    mask_l = (col >= 1).astype(jnp.float32)          # tap dx = -1 valid
    mask_r = (col <= W - 2).astype(jnp.float32)      # tap dx = +1 valid

    # im2col over the ORIGINAL-resolution image: 9 taps x 2 streams of lane-offset
    # loads, masked in f32 and stored straight into the VMEM patch scratch.
    for a in range(K):
        for b in range(K):
            off = (a - pad) * W + (b - pad)          # static python int
            start = pad_flat + off
            t = a * K + b
            for s in range(2):                       # 0 = real, 1 = imag stream
                sh = x_ref[s, 0, :, start:start + n]  # (C_in, n) lane-dense
                if b == 0:
                    sh = sh * mask_l
                elif b == K - 1:
                    sh = sh * mask_r
                row = (t * 2 + s) * C_in
                patch_ref[row:row + C_in, :] = sh

    # Upsample + complex HConv2d + BatchNorm as ONE bf16 MXU matmul.
    y = jnp.dot(w_ref[...], patch_ref[...].astype(jnp.bfloat16),
                preferred_element_type=jnp.float32)   # (2*4*C_out, n) f32

    P = 4 * C_out
    y_re = y[:P, :]
    y_im = y[P:, :]

    # ScalarGate2d: sigmoid(1x1 conv of |z| + b) gates re and im.  The block-
    # diagonal weight applies the same (C_out, C_out) mix independently per phase.
    mag = jnp.sqrt(y_re * y_re + y_im * y_im)
    g_lin = jnp.dot(gw_ref[...], mag,
                    preferred_element_type=jnp.float32) + gb_ref[...]
    gate = pl.reciprocal(1.0 + jnp.exp(-g_lin), approx=True)   # exp + rcp on EUP

    o_ref[0, :P, :] = (y_re * gate).astype(o_ref.dtype)
    o_ref[0, P:, :] = (y_im * gate).astype(o_ref.dtype)


def hnet_upsample_block_forward(x, w_re, w_im, bn_gamma, bn_var, gate_w, gate_b,
                                *, size=3, eps=1e-5):
    """x: (2, B, C_in, H, W) harmonic complex features ([0]=real, [1]=imag).
    w_re, w_im: (C_out, C_in, K, K) complex HConv2d weights (no bias).
    bn_gamma, bn_var: (C_out,) harmonic BatchNorm2d scale / running variance.
    gate_w, gate_b: (C_out, C_out) / (C_out,) ScalarGate2d 1x1-conv parameters.
    Returns gated complex features: (2, B, C_out, 2*H, 2*W)."""
    two, B, C_in, H, W = x.shape
    assert two == 2
    # TODO(synk): the polyphase fold of upsample+conv below is specialized to the
    # module default size=3 ('same' padding); other sizes need a generalized A.
    assert size == 3
    C_out = w_re.shape[0]
    K = size
    pad = (K - 1) // 2
    N = H * W
    pad_flat = pad * W + pad
    NP = 4                                   # 2x2 nearest-upsample phases

    # Flatten + flat-pad the ORIGINAL-resolution image (no upsample materialized;
    # it is folded into the weights below).
    # TODO(synk): the library's upsample_2d interpolation mode is unspecified;
    # nearest x2 is assumed (a different mode invalidates the polyphase fold).
    x_flat = x.reshape(2, B, C_in, N).astype(jnp.float32)
    x_pad = jnp.pad(x_flat, ((0, 0), (0, 0), (0, 0), (pad_flat, pad_flat)))

    # Polyphase row/col mixing matrices for nearest-2x upsample followed by a
    # 3x3 'same' conv:  A[p][row_offset+1, ky].
    A = jnp.array([[[1., 0., 0.], [0., 1., 1.], [0., 0., 0.]],
                   [[0., 0., 0.], [1., 1., 0.], [0., 0., 1.]]], jnp.float32)

    # Complex conv as a real 2x2 block over (re, im) streams.
    w_c = jnp.stack([jnp.stack([w_re, -w_im], axis=0),
                     jnp.stack([w_im, w_re], axis=0)],
                    axis=0).astype(jnp.float32)       # (s_out, s_in, O, I, K, K)
    # Per-phase effective 3x3 weights on the original-resolution tap grid.
    w_eff = jnp.einsum('yak,xbl,uvoikl->yxuvoiab', A, A, w_c)

    # Harmonic BatchNorm2d (inference): per-channel scale only (no centering, to
    # preserve rotation equivariance) — folded into the conv weights for free.
    # TODO(synk): exact harmonic BatchNorm2d parameterization / training-mode
    # batch statistics are library-specific; running-stat scaling is used.
    bn_scale = (bn_gamma / jnp.sqrt(bn_var + eps)).astype(jnp.float32)
    w_eff = w_eff * bn_scale[None, None, None, None, :, None, None, None]

    # Row order (s_out, py, px, o); col order (tap a,b, s_in, c_in); ship bf16.
    w_slab = jnp.transpose(w_eff, (2, 0, 1, 4, 6, 7, 3, 5)).reshape(
        2 * NP * C_out, K * K * 2 * C_in).astype(jnp.bfloat16)

    # Block-diagonal ScalarGate weights: same (C_out, C_out) mix per phase.
    gwb = jnp.kron(jnp.eye(NP, dtype=jnp.float32), gate_w.astype(jnp.float32))
    gbt = jnp.tile(gate_b.astype(jnp.float32), NP).reshape(NP * C_out, 1)

    kernel = functools.partial(_hnet_upsample_kernel,
                               C_in=C_in, C_out=C_out, W=W, K=K, pad=pad)
    out_flat = pl.pallas_call(
        kernel,
        out_shape=jax.ShapeDtypeStruct((B, 2 * NP * C_out, N), jnp.float32),
        grid_spec=pltpu.PrefetchScalarGridSpec(
            num_scalar_prefetch=0,
            grid=(B,),
            in_specs=[
                pl.BlockSpec((2, 1, C_in, N + 2 * pad_flat),
                             lambda b: (0, b, 0, 0)),
                pl.BlockSpec((2 * NP * C_out, K * K * 2 * C_in),
                             lambda b: (0, 0)),
                pl.BlockSpec((NP * C_out, NP * C_out), lambda b: (0, 0)),
                pl.BlockSpec((NP * C_out, 1), lambda b: (0, 0)),
            ],
            out_specs=pl.BlockSpec((1, 2 * NP * C_out, N), lambda b: (b, 0, 0)),
            scratch_shapes=[pltpu.VMEM((K * K * 2 * C_in, N), jnp.float32)],
        ),
        compiler_params=pltpu.CompilerParams(
            dimension_semantics=("parallel",)),
    )(x_pad, w_slab, gwb, gbt)

    # Depth-to-space: (B, s, py, px, C_out, H, W) -> (s, B, C_out, 2H, 2W).
    out = out_flat.reshape(B, 2, 2, 2, C_out, H, W)
    out = jnp.transpose(out, (1, 0, 4, 5, 2, 6, 3))
    return out.reshape(2, B, C_out, 2 * H, 2 * W)


def make_hconv_weights(key, in_repr, out_repr, size):
    """Deterministic synthetic HConv2d weights.

    Harmonic conv kernels between rotation orders m -> n have the form
    R(r) * exp(i*((n - m)*phi + beta)).
    # TODO(synk): HConv2d's exact learned radial-profile parameterization is
    # library-specific; a Gaussian radial envelope with per-pair scale and phase
    # is used as a deterministic synthetic stand-in with the same structure.
    """
    C_in = sum(in_repr)
    C_out = sum(out_repr)
    in_orders = jnp.concatenate(
        [jnp.full((c,), float(m), jnp.float32) for m, c in enumerate(in_repr)])
    out_orders = jnp.concatenate(
        [jnp.full((c,), float(n), jnp.float32) for n, c in enumerate(out_repr)])
    d = out_orders[:, None] - in_orders[None, :]

    k1, k2 = jax.random.split(key)
    scale = 0.5 * jax.random.normal(k1, (C_out, C_in), dtype=jnp.float32)
    beta = 2.0 * jnp.pi * jax.random.uniform(k2, (C_out, C_in), dtype=jnp.float32)

    r0 = (size - 1) / 2.0
    ys = jnp.arange(size, dtype=jnp.float32) - r0
    xs = jnp.arange(size, dtype=jnp.float32) - r0
    yy, xx = jnp.meshgrid(ys, xs, indexing="ij")
    r = jnp.sqrt(yy ** 2 + xx ** 2)
    phi = jnp.arctan2(yy, xx)
    envelope = jnp.exp(-0.5 * r ** 2)

    ang = d[:, :, None, None] * phi[None, None] + beta[:, :, None, None]
    w_re = scale[:, :, None, None] * envelope[None, None] * jnp.cos(ang)
    w_im = scale[:, :, None, None] * envelope[None, None] * jnp.sin(ang)
    return w_re.astype(jnp.float32), w_im.astype(jnp.float32)


def reference_forward(x, w_re, w_im, bn_gamma, bn_var, gate_w, gate_b, *, eps=1e-5):
    """Plain-JAX f32 reference of the module forward (for verification)."""
    up = jnp.repeat(jnp.repeat(x, 2, axis=-2), 2, axis=-1)
    dn = ("NCHW", "OIHW", "NCHW")
    conv = lambda a, w: lax.conv_general_dilated(a, w, (1, 1), "SAME",
                                                 dimension_numbers=dn)
    y_re = conv(up[0], w_re) - conv(up[1], w_im)
    y_im = conv(up[0], w_im) + conv(up[1], w_re)
    scale = (bn_gamma / jnp.sqrt(bn_var + eps))[None, :, None, None]
    y_re = y_re * scale
    y_im = y_im * scale
    mag = jnp.sqrt(y_re ** 2 + y_im ** 2)
    # TODO(synk): ScalarGate2d gate-network depth is library-specific; a single
    # 1x1 conv + sigmoid gate on the magnitudes is assumed (kernel matches).
    g_lin = jnp.einsum("oc,bchw->bohw", gate_w, mag) + gate_b[None, :, None, None]
    gate = jax.nn.sigmoid(g_lin)
    return jnp.stack([y_re * gate, y_im * gate], axis=0)


if __name__ == "__main__":
    key = jax.random.PRNGKey(0)
    kx, kw, kb1, kb2, kg1, kg2 = jax.random.split(key, 6)

    in_repr = (2, 2)     # 2 channels of rotation order 0, 2 of order 1
    out_repr = (2, 2)
    B, H, W = 2, 16, 16
    size = 3
    C_in, C_out = sum(in_repr), sum(out_repr)

    x = jax.random.normal(kx, (2, B, C_in, H, W), dtype=jnp.float32)
    w_re, w_im = make_hconv_weights(kw, in_repr, out_repr, size)
    bn_gamma = 0.5 + jax.random.uniform(kb1, (C_out,), dtype=jnp.float32)
    bn_var = 0.5 + jax.random.uniform(kb2, (C_out,), dtype=jnp.float32)
    gate_w = 0.5 * jax.random.normal(kg1, (C_out, C_out), dtype=jnp.float32)
    gate_b = 0.1 * jax.random.normal(kg2, (C_out,), dtype=jnp.float32)

    fwd = jax.jit(hnet_upsample_block_forward)
    out = fwd(x, w_re, w_im, bn_gamma, bn_var, gate_w, gate_b)
    out = jax.block_until_ready(out)

    ref = reference_forward(x, w_re, w_im, bn_gamma, bn_var, gate_w, gate_b)
    assert out.shape == (2, B, C_out, 2 * H, 2 * W)
    max_err = float(jnp.max(jnp.abs(out - ref)))
    # Tolerance loosened for the bf16 MXU conv dot + approx-reciprocal sigmoid.
    assert jnp.allclose(out, ref, atol=8e-2, rtol=5e-2), max_err
    print("KERNEL_OK")
</pallas_src>

<mosaic_0001>
module attributes {stable_mosaic.version = 11 : i64} {
  func.func @_hnet_upsample_kernel(%arg0: i32, %arg1: memref<2x1x4x290xf32, #tpu.memory_space<vmem>>, %arg2: memref<32x72xbf16, #tpu.memory_space<vmem>>, %arg3: memref<16x16xf32, #tpu.memory_space<vmem>>, %arg4: memref<16x1xf32, #tpu.memory_space<vmem>>, %arg5: memref<1x32x256xf32, #tpu.memory_space<vmem>>, %arg6: memref<72x256xf32, #tpu.memory_space<vmem>>) attributes {dimension_semantics = [#tpu.dimension_semantics<parallel>], iteration_bounds = array<i64: 2>, scalar_prefetch = 0 : i64, scratch_operands = 1 : i64, tpu.core_type = #tpu.core_type<tc>, window_params = [{transform_indices = @transform_0, window_bounds = array<i64: 2, 1, 4, 290>}, {pipeline_mode = #tpu.pipeline_mode<synchronous>, transform_indices = @transform_1, window_bounds = array<i64: 32, 72>}, {pipeline_mode = #tpu.pipeline_mode<synchronous>, transform_indices = @transform_2, window_bounds = array<i64: 16, 16>}, {pipeline_mode = #tpu.pipeline_mode<synchronous>, transform_indices = @transform_3, window_bounds = array<i64: 16, 1>}, {transform_indices = @transform_4, window_bounds = array<i64: 1, 32, 256>}]} {
    %0 = tpu.iota {dimensions = array<i32: 1>} : vector<1x256xi32>
    %c16_i32 = arith.constant 16 : i32
    %c0_i32 = arith.constant 0 : i32
    %1 = arith.cmpi eq, %c16_i32, %c0_i32 : i32
    %c1_i32 = arith.constant 1 : i32
    %2 = arith.select %1, %c1_i32, %c16_i32 : i32
    %3 = vector.broadcast %2 : i32 to vector<1x256xi32>
    %4 = arith.remsi %0, %3 : vector<1x256xi32>
    %c0_i32_0 = arith.constant 0 : i32
    %5 = vector.broadcast %c0_i32_0 : i32 to vector<1x256xi32>
    %6 = arith.cmpi ne, %4, %5 : vector<1x256xi32>
    %c0_i32_1 = arith.constant 0 : i32
    %7 = vector.broadcast %c0_i32_1 : i32 to vector<1x256xi32>
    %8 = arith.cmpi slt, %4, %7 : vector<1x256xi32>
    %c0_i32_2 = arith.constant 0 : i32
    %9 = arith.cmpi slt, %2, %c0_i32_2 : i32
    %10 = vector.broadcast %9 : i1 to vector<1x256xi1>
    %11 = vector.broadcast %10 : vector<1x256xi1> to vector<1x256xi1>
    %12 = arith.xori %8, %11 : vector<1x256xi1>
    %13 = arith.andi %12, %6 : vector<1x256xi1>
    %14 = vector.broadcast %2 : i32 to vector<1x256xi32>
    %15 = arith.addi %4, %14 : vector<1x256xi32>
    %16 = arith.select %13, %15, %4 : vector<1x256xi1>, vector<1x256xi32>
    %c1_i32_3 = arith.constant 1 : i32
    %17 = vector.broadcast %c1_i32_3 : i32 to vector<1x256xi32>
    %18 = arith.cmpi sge, %16, %17 : vector<1x256xi32>
    %19 = arith.extui %18 : vector<1x256xi1> to vector<1x256xi32>
    %20 = arith.sitofp %19 : vector<1x256xi32> to vector<1x256xf32>
    %c14_i32 = arith.constant 14 : i32
    %21 = vector.broadcast %c14_i32 : i32 to vector<1x256xi32>
    %22 = arith.cmpi sle, %16, %21 : vector<1x256xi32>
    %23 = arith.extui %22 : vector<1x256xi1> to vector<1x256xi32>
    %24 = arith.sitofp %23 : vector<1x256xi32> to vector<1x256xf32>
    %c0 = arith.constant 0 : index
    %c0_4 = arith.constant 0 : index
    %c0_5 = arith.constant 0 : index
    %c0_6 = arith.constant 0 : index
    %25 = vector.load %arg1[%c0, %c0_4, %c0_5, %c0_6] : memref<2x1x4x290xf32, #tpu.memory_space<vmem>>, vector<1x1x4x256xf32>
    %26 = vector.shape_cast %25 : vector<1x1x4x256xf32> to vector<4x256xf32>
    %27 = vector.broadcast %20 : vector<1x256xf32> to vector<4x256xf32>
    %28 = arith.mulf %26, %27 : vector<4x256xf32>
    %c0_7 = arith.constant 0 : index
    %c0_8 = arith.constant 0 : index
    %29 = vector.load %arg6[%c0_7, %c0_8] : memref<72x256xf32, #tpu.memory_space<vmem>>, vector<4x256xf32>
    tpu.vector_store %arg6[%c0_7, %c0_8], %28 {strides = array<i32>} : memref<72x256xf32, #tpu.memory_space<vmem>>, vector<4x256xf32>,
    %c1 = arith.constant 1 : index
    %c0_9 = arith.constant 0 : index
    %c0_10 = arith.constant 0 : index
    %c0_11 = arith.constant 0 : index
    %30 = vector.load %arg1[%c1, %c0_9, %c0_10, %c0_11] : memref<2x1x4x290xf32, #tpu.memory_space<vmem>>, vector<1x1x4x256xf32>
    %31 = vector.shape_cast %30 : vector<1x1x4x256xf32> to vector<4x256xf32>
    %32 = vector.broadcast %20 : vector<1x256xf32> to vector<4x256xf32>
    %33 = arith.mulf %31, %32 : vector<4x256xf32>
    %c4 = arith.constant 4 : index
    %c0_12 = arith.constant 0 : index
    %34 = vector.load %arg6[%c4, %c0_12] : memref<72x256xf32, #tpu.memory_space<vmem>>, vector<4x256xf32>
    tpu.vector_store %arg6[%c4, %c0_12], %33 {strides = array<i32>} : memref<72x256xf32, #tpu.memory_space<vmem>>, vector<4x256xf32>,
    %c0_13 = arith.constant 0 : index
    %c0_14 = arith.constant 0 : index
    %c0_15 = arith.constant 0 : index
    %c1_16 = arith.constant 1 : index
    %35 = vector.load %arg1[%c0_13, %c0_14, %c0_15, %c1_16] : memref<2x1x4x290xf32, #tpu.memory_space<vmem>>, vector<1x1x4x256xf32>
    %36 = vector.shape_cast %35 : vector<1x1x4x256xf32> to vector<4x256xf32>
    %c8 = arith.constant 8 : index
    %c0_17 = arith.constant 0 : index
    %37 = vector.load %arg6[%c8, %c0_17] : memref<72x256xf32, #tpu.memory_space<vmem>>, vector<4x256xf32>
    tpu.vector_store %arg6[%c8, %c0_17], %36 {strides = array<i32>} : memref<72x256xf32, #tpu.memory_space<vmem>>, vector<4x256xf32>,
    %c1_18 = arith.constant 1 : index
    %c0_19 = arith.constant 0 : index
    %c0_20 = arith.constant 0 : index
    %c1_21 = arith.constant 1 : index
    %38 = vector.load %arg1[%c1_18, %c0_19, %c0_20, %c1_21] : memref<2x1x4x290xf32, #tpu.memory_space<vmem>>, vector<1x1x4x256xf32>
    %39 = vector.shape_cast %38 : vector<1x1x4x256xf32> to vector<4x256xf32>
    %c12 = arith.constant 12 : index
    %c0_22 = arith.constant 0 : index
    %40 = vector.load %arg6[%c12, %c0_22] : memref<72x256xf32, #tpu.memory_space<vmem>>, vector<4x256xf32>
    tpu.vector_store %arg6[%c12, %c0_22], %39 {strides = array<i32>} : memref<72x256xf32, #tpu.memory_space<vmem>>, vector<4x256xf32>,
    %c0_23 = arith.constant 0 : index
    %c0_24 = arith.constant 0 : index
    %c0_25 = arith.constant 0 : index
    %c2 = arith.constant 2 : index
    %41 = vector.load %arg1[%c0_23, %c0_24, %c0_25, %c2] : memref<2x1x4x290xf32, #tpu.memory_space<vmem>>, vector<1x1x4x256xf32>
    %42 = vector.shape_cast %41 : vector<1x1x4x256xf32> to vector<4x256xf32>
    %43 = vector.broadcast %24 : vector<1x256xf32> to vector<4x256xf32>
    %44 = arith.mulf %42, %43 : vector<4x256xf32>
    %c16 = arith.constant 16 : index
    %c0_26 = arith.constant 0 : index
    %45 = vector.load %arg6[%c16, %c0_26] : memref<72x256xf32, #tpu.memory_space<vmem>>, vector<4x256xf32>
    tpu.vector_store %arg6[%c16, %c0_26], %44 {strides = array<i32>} : memref<72x256xf32, #tpu.memory_space<vmem>>, vector<4x256xf32>,
    %c1_27 = arith.constant 1 : index
    %c0_28 = arith.constant 0 : index
    %c0_29 = arith.constant 0 : index
    %c2_30 = arith.constant 2 : index
    %46 = vector.load %arg1[%c1_27, %c0_28, %c0_29, %c2_30] : memref<2x1x4x290xf32, #tpu.memory_space<vmem>>, vector<1x1x4x256xf32>
    %47 = vector.shape_cast %46 : vector<1x1x4x256xf32> to vector<4x256xf32>
    %48 = vector.broadcast %24 : vector<1x256xf32> to vector<4x256xf32>
    %49 = arith.mulf %47, %48 : vector<4x256xf32>
    %c20 = arith.constant 20 : index
    %c0_31 = arith.constant 0 : index
    %50 = vector.load %arg6[%c20, %c0_31] : memref<72x256xf32, #tpu.memory_space<vmem>>, vector<4x256xf32>
    tpu.vector_store %arg6[%c20, %c0_31], %49 {strides = array<i32>} : memref<72x256xf32, #tpu.memory_space<vmem>>, vector<4x256xf32>,
    %c0_32 = arith.constant 0 : index
    %c0_33 = arith.constant 0 : index
    %c0_34 = arith.constant 0 : index
    %c16_35 = arith.constant 16 : index
    %51 = vector.load %arg1[%c0_32, %c0_33, %c0_34, %c16_35] : memref<2x1x4x290xf32, #tpu.memory_space<vmem>>, vector<1x1x4x256xf32>
    %52 = vector.shape_cast %51 : vector<1x1x4x256xf32> to vector<4x256xf32>
    %53 = vector.broadcast %20 : vector<1x256xf32> to vector<4x256xf32>
    %54 = arith.mulf %52, %53 : vector<4x256xf32>
    %c24 = arith.constant 24 : index
    %c0_36 = arith.constant 0 : index
    %55 = vector.load %arg6[%c24, %c0_36] : memref<72x256xf32, #tpu.memory_space<vmem>>, vector<4x256xf32>
    tpu.vector_store %arg6[%c24, %c0_36], %54 {strides = array<i32>} : memref<72x256xf32, #tpu.memory_space<vmem>>, vector<4x256xf32>,
    %c1_37 = arith.constant 1 : index
    %c0_38 = arith.constant 0 : index
    %c0_39 = arith.constant 0 : index
    %c16_40 = arith.constant 16 : index
    %56 = vector.load %arg1[%c1_37, %c0_38, %c0_39, %c16_40] : memref<2x1x4x290xf32, #tpu.memory_space<vmem>>, vector<1x1x4x256xf32>
    %57 = vector.shape_cast %56 : vector<1x1x4x256xf32> to vector<4x256xf32>
    %58 = vector.broadcast %20 : vector<1x256xf32> to vector<4x256xf32>
    %59 = arith.mulf %57, %58 : vector<4x256xf32>
    %c28 = arith.constant 28 : index
    %c0_41 = arith.constant 0 : index
    %60 = vector.load %arg6[%c28, %c0_41] : memref<72x256xf32, #tpu.memory_space<vmem>>, vector<4x256xf32>
    tpu.vector_store %arg6[%c28, %c0_41], %59 {strides = array<i32>} : memref<72x256xf32, #tpu.memory_space<vmem>>, vector<4x256xf32>,
    %c0_42 = arith.constant 0 : index
    %c0_43 = arith.constant 0 : index
    %c0_44 = arith.constant 0 : index
    %c17 = arith.constant 17 : index
    %61 = vector.load %arg1[%c0_42, %c0_43, %c0_44, %c17] : memref<2x1x4x290xf32, #tpu.memory_space<vmem>>, vector<1x1x4x256xf32>
    %62 = vector.shape_cast %61 : vector<1x1x4x256xf32> to vector<4x256xf32>
    %c32 = arith.constant 32 : index
    %c0_45 = arith.constant 0 : index
    %63 = vector.load %arg6[%c32, %c0_45] : memref<72x256xf32, #tpu.memory_space<vmem>>, vector<4x256xf32>
    tpu.vector_store %arg6[%c32, %c0_45], %62 {strides = array<i32>} : memref<72x256xf32, #tpu.memory_space<vmem>>, vector<4x256xf32>,
    %c1_46 = arith.constant 1 : index
    %c0_47 = arith.constant 0 : index
    %c0_48 = arith.constant 0 : index
    %c17_49 = arith.constant 17 : index
    %64 = vector.load %arg1[%c1_46, %c0_47, %c0_48, %c17_49] : memref<2x1x4x290xf32, #tpu.memory_space<vmem>>, vector<1x1x4x256xf32>
    %65 = vector.shape_cast %64 : vector<1x1x4x256xf32> to vector<4x256xf32>
    %c36 = arith.constant 36 : index
    %c0_50 = arith.constant 0 : index
    %66 = vector.load %arg6[%c36, %c0_50] : memref<72x256xf32, #tpu.memory_space<vmem>>, vector<4x256xf32>
    tpu.vector_store %arg6[%c36, %c0_50], %65 {strides = array<i32>} : memref<72x256xf32, #tpu.memory_space<vmem>>, vector<4x256xf32>,
    %c0_51 = arith.constant 0 : index
    %c0_52 = arith.constant 0 : index
    %c0_53 = arith.constant 0 : index
    %c18 = arith.constant 18 : index
    %67 = vector.load %arg1[%c0_51, %c0_52, %c0_53, %c18] : memref<2x1x4x290xf32, #tpu.memory_space<vmem>>, vector<1x1x4x256xf32>
    %68 = vector.shape_cast %67 : vector<1x1x4x256xf32> to vector<4x256xf32>
    %69 = vector.broadcast %24 : vector<1x256xf32> to vector<4x256xf32>
    %70 = arith.mulf %68, %69 : vector<4x256xf32>
    %c40 = arith.constant 40 : index
    %c0_54 = arith.constant 0 : index
    %71 = vector.load %arg6[%c40, %c0_54] : memref<72x256xf32, #tpu.memory_space<vmem>>, vector<4x256xf32>
    tpu.vector_store %arg6[%c40, %c0_54], %70 {strides = array<i32>} : memref<72x256xf32, #tpu.memory_space<vmem>>, vector<4x256xf32>,
    %c1_55 = arith.constant 1 : index
    %c0_56 = arith.constant 0 : index
    %c0_57 = arith.constant 0 : index
    %c18_58 = arith.constant 18 : index
    %72 = vector.load %arg1[%c1_55, %c0_56, %c0_57, %c18_58] : memref<2x1x4x290xf32, #tpu.memory_space<vmem>>, vector<1x1x4x256xf32>
    %73 = vector.shape_cast %72 : vector<1x1x4x256xf32> to vector<4x256xf32>
    %74 = vector.broadcast %24 : vector<1x256xf32> to vector<4x256xf32>
    %75 = arith.mulf %73, %74 : vector<4x256xf32>
    %c44 = arith.constant 44 : index
    %c0_59 = arith.constant 0 : index
    %76 = vector.load %arg6[%c44, %c0_59] : memref<72x256xf32, #tpu.memory_space<vmem>>, vector<4x256xf32>
    tpu.vector_store %arg6[%c44, %c0_59], %75 {strides = array<i32>} : memref<72x256xf32, #tpu.memory_space<vmem>>, vector<4x256xf32>,
    %c0_60 = arith.constant 0 : index
    %c0_61 = arith.constant 0 : index
    %c0_62 = arith.constant 0 : index
    %c32_63 = arith.constant 32 : index
    %77 = vector.load %arg1[%c0_60, %c0_61, %c0_62, %c32_63] : memref<2x1x4x290xf32, #tpu.memory_space<vmem>>, vector<1x1x4x256xf32>
    %78 = vector.shape_cast %77 : vector<1x1x4x256xf32> to vector<4x256xf32>
    %79 = vector.broadcast %20 : vector<1x256xf32> to vector<4x256xf32>
    %80 = arith.mulf %78, %79 : vector<4x256xf32>
    %c48 = arith.constant 48 : index
    %c0_64 = arith.constant 0 : index
    %81 = vector.load %arg6[%c48, %c0_64] : memref<72x256xf32, #tpu.memory_space<vmem>>, vector<4x256xf32>
    tpu.vector_store %arg6[%c48, %c0_64], %80 {strides = array<i32>} : memref<72x256xf32, #tpu.memory_space<vmem>>, vector<4x256xf32>,
    %c1_65 = arith.constant 1 : index
    %c0_66 = arith.constant 0 : index
    %c0_67 = arith.constant 0 : index
    %c32_68 = arith.constant 32 : index
    %82 = vector.load %arg1[%c1_65, %c0_66, %c0_67, %c32_68] : memref<2x1x4x290xf32, #tpu.memory_space<vmem>>, vector<1x1x4x256xf32>
    %83 = vector.shape_cast %82 : vector<1x1x4x256xf32> to vector<4x256xf32>
    %84 = vector.broadcast %20 : vector<1x256xf32> to vector<4x256xf32>
    %85 = arith.mulf %83, %84 : vector<4x256xf32>
    %c52 = arith.constant 52 : index
    %c0_69 = arith.constant 0 : index
    %86 = vector.load %arg6[%c52, %c0_69] : memref<72x256xf32, #tpu.memory_space<vmem>>, vector<4x256xf32>
    tpu.vector_store %arg6[%c52, %c0_69], %85 {strides = array<i32>} : memref<72x256xf32, #tpu.memory_space<vmem>>, vector<4x256xf32>,
    %c0_70 = arith.constant 0 : index
    %c0_71 = arith.constant 0 : index
    %c0_72 = arith.constant 0 : index
    %c33 = arith.constant 33 : index
    %87 = vector.load %arg1[%c0_70, %c0_71, %c0_72, %c33] : memref<2x1x4x290xf32, #tpu.memory_space<vmem>>, vector<1x1x4x256xf32>
    %88 = vector.shape_cast %87 : vector<1x1x4x256xf32> to vector<4x256xf32>
    %c56 = arith.constant 56 : index
    %c0_73 = arith.constant 0 : index
    %89 = vector.load %arg6[%c56, %c0_73] : memref<72x256xf32, #tpu.memory_space<vmem>>, vector<4x256xf32>
    tpu.vector_store %arg6[%c56, %c0_73], %88 {strides = array<i32>} : memref<72x256xf32, #tpu.memory_space<vmem>>, vector<4x256xf32>,
    %c1_74 = arith.constant 1 : index
    %c0_75 = arith.constant 0 : index
    %c0_76 = arith.constant 0 : index
    %c33_77 = arith.constant 33 : index
    %90 = vector.load %arg1[%c1_74, %c0_75, %c0_76, %c33_77] : memref<2x1x4x290xf32, #tpu.memory_space<vmem>>, vector<1x1x4x256xf32>
    %91 = vector.shape_cast %90 : vector<1x1x4x256xf32> to vector<4x256xf32>
    %c60 = arith.constant 60 : index
    %c0_78 = arith.constant 0 : index
    %92 = vector.load %arg6[%c60, %c0_78] : memref<72x256xf32, #tpu.memory_space<vmem>>, vector<4x256xf32>
    tpu.vector_store %arg6[%c60, %c0_78], %91 {strides = array<i32>} : memref<72x256xf32, #tpu.memory_space<vmem>>, vector<4x256xf32>,
    %c0_79 = arith.constant 0 : index
    %c0_80 = arith.constant 0 : index
    %c0_81 = arith.constant 0 : index
    %c34 = arith.constant 34 : index
    %93 = vector.load %arg1[%c0_79, %c0_80, %c0_81, %c34] : memref<2x1x4x290xf32, #tpu.memory_space<vmem>>, vector<1x1x4x256xf32>
    %94 = vector.shape_cast %93 : vector<1x1x4x256xf32> to vector<4x256xf32>
    %95 = vector.broadcast %24 : vector<1x256xf32> to vector<4x256xf32>
    %96 = arith.mulf %94, %95 : vector<4x256xf32>
    %c64 = arith.constant 64 : index
    %c0_82 = arith.constant 0 : index
    %97 = vector.load %arg6[%c64, %c0_82] : memref<72x256xf32, #tpu.memory_space<vmem>>, vector<4x256xf32>
    tpu.vector_store %arg6[%c64, %c0_82], %96 {strides = array<i32>} : memref<72x256xf32, #tpu.memory_space<vmem>>, vector<4x256xf32>,
    %c1_83 = arith.constant 1 : index
    %c0_84 = arith.constant 0 : index
    %c0_85 = arith.constant 0 : index
    %c34_86 = arith.constant 34 : index
    %98 = vector.load %arg1[%c1_83, %c0_84, %c0_85, %c34_86] : memref<2x1x4x290xf32, #tpu.memory_space<vmem>>, vector<1x1x4x256xf32>
    %99 = vector.shape_cast %98 : vector<1x1x4x256xf32> to vector<4x256xf32>
    %100 = vector.broadcast %24 : vector<1x256xf32> to vector<4x256xf32>
    %101 = arith.mulf %99, %100 : vector<4x256xf32>
    %c68 = arith.constant 68 : index
    %c0_87 = arith.constant 0 : index
    %102 = vector.load %arg6[%c68, %c0_87] : memref<72x256xf32, #tpu.memory_space<vmem>>, vector<4x256xf32>
    tpu.vector_store %arg6[%c68, %c0_87], %101 {strides = array<i32>} : memref<72x256xf32, #tpu.memory_space<vmem>>, vector<4x256xf32>,
    %c0_88 = arith.constant 0 : index
    %c0_89 = arith.constant 0 : index
    %103 = vector.load %arg2[%c0_88, %c0_89] : memref<32x72xbf16, #tpu.memory_space<vmem>>, vector<32x72xbf16>
    %c0_90 = arith.constant 0 : index
    %c0_91 = arith.constant 0 : index
    %104 = vector.load %arg6[%c0_90, %c0_91] : memref<72x256xf32, #tpu.memory_space<vmem>>, vector<72x256xf32>
    %105 = arith.truncf %104 : vector<72x256xf32> to vector<72x256xbf16>
    %cst = arith.constant dense<0.000000e+00> : vector<32x256xf32>
    %106 = tpu.matmul %103, %105, %cst {dimension_numbers = #tpu.dot_dimension_numbers<[1], [0], [0], [1], [0, 0, 1, 1], [], []>} : vector<32x72xbf16>, vector<72x256xbf16>, vector<32x256xf32> -> vector<32x256xf32>
    %107 = vector.extract_strided_slice %106 {offsets = [0, 0], sizes = [16, 256], strides = [1, 1]} : vector<32x256xf32> to vector<16x256xf32>
    %108 = vector.extract_strided_slice %106 {offsets = [16, 0], sizes = [16, 256], strides = [1, 1]} : vector<32x256xf32> to vector<16x256xf32>
    %109 = arith.mulf %107, %107 : vector<16x256xf32>
    %110 = arith.mulf %108, %108 : vector<16x256xf32>
    %111 = arith.addf %109, %110 : vector<16x256xf32>
    %112 = math.sqrt %111 : vector<16x256xf32>
    %c0_92 = arith.constant 0 : index
    %c0_93 = arith.constant 0 : index
    %113 = vector.load %arg3[%c0_92, %c0_93] : memref<16x16xf32, #tpu.memory_space<vmem>>, vector<16x16xf32>
    %cst_94 = arith.constant dense<0.000000e+00> : vector<16x256xf32>
    %114 = tpu.matmul %113, %112, %cst_94 {dimension_numbers = #tpu.dot_dimension_numbers<[1], [0], [0], [1], [0, 0, 1, 1], [], []>} : vector<16x16xf32>, vector<16x256xf32>, vector<16x256xf32> -> vector<16x256xf32>
    %c0_95 = arith.constant 0 : index
    %c0_96 = arith.constant 0 : index
    %115 = vector.load %arg4[%c0_95, %c0_96] : memref<16x1xf32, #tpu.memory_space<vmem>>, vector<16x1xf32>
    %116 = vector.broadcast %115 : vector<16x1xf32> to vector<16x256xf32>
    %117 = arith.addf %114, %116 : vector<16x256xf32>
    %cst_97 = arith.constant 0.000000e+00 : f32
    %118 = vector.broadcast %cst_97 : f32 to vector<16x256xf32>
    %119 = arith.subf %118, %117 : vector<16x256xf32>
    %120 = math.exp %119 : vector<16x256xf32>
    %cst_98 = arith.constant 1.000000e+00 : f32
    %121 = vector.broadcast %cst_98 : f32 to vector<16x256xf32>
    %122 = arith.addf %121, %120 : vector<16x256xf32>
    %123 = tpu.reciprocal %122 {approx = true} : vector<16x256xf32> -> vector<16x256xf32>
    %124 = arith.mulf %107, %123 : vector<16x256xf32>
    %c0_99 = arith.constant 0 : index
    %c0_100 = arith.constant 0 : index
    %c0_101 = arith.constant 0 : index
    %125 = vector.load %arg5[%c0_99, %c0_100, %c0_101] : memref<1x32x256xf32, #tpu.memory_space<vmem>>, vector<1x16x256xf32>
    %126 = vector.shape_cast %125 : vector<1x16x256xf32> to vector<16x256xf32>
    %127 = vector.shape_cast %124 : vector<16x256xf32> to vector<1x16x256xf32>
    tpu.vector_store %arg5[%c0_99, %c0_100, %c0_101], %127 {strides = array<i32>} : memref<1x32x256xf32, #tpu.memory_space<vmem>>, vector<1x16x256xf32>,
    %128 = arith.mulf %108, %123 : vector<16x256xf32>
    %c0_102 = arith.constant 0 : index
    %c16_103 = arith.constant 16 : index
    %c0_104 = arith.constant 0 : index
    %129 = vector.load %arg5[%c0_102, %c16_103, %c0_104] : memref<1x32x256xf32, #tpu.memory_space<vmem>>, vector<1x16x256xf32>
    %130 = vector.shape_cast %129 : vector<1x16x256xf32> to vector<16x256xf32>
    %131 = vector.shape_cast %128 : vector<16x256xf32> to vector<1x16x256xf32>
    tpu.vector_store %arg5[%c0_102, %c16_103, %c0_104], %131 {strides = array<i32>} : memref<1x32x256xf32, #tpu.memory_space<vmem>>, vector<1x16x256xf32>,
    return
  }
  func.func @transform_0(%arg0: i32) -> (i32, i32, i32, i32) {
    %c0_i32 = arith.constant 0 : i32
    %c0_i32_0 = arith.constant 0 : i32
    %c0_i32_1 = arith.constant 0 : i32
    %c0_i32_2 = arith.constant 0 : i32
    return %c0_i32, %arg0, %c0_i32_0, %c0_i32_1 : i32, i32, i32, i32
  }
  func.func @transform_1(%arg0: i32) -> (i32, i32) {
    %c0_i32 = arith.constant 0 : i32
    %c0_i32_0 = arith.constant 0 : i32
    %c0_i32_1 = arith.constant 0 : i32
    return %c0_i32, %c0_i32_0 : i32, i32
  }
  func.func @transform_2(%arg0: i32) -> (i32, i32) {
    %c0_i32 = arith.constant 0 : i32
    %c0_i32_0 = arith.constant 0 : i32
    %c0_i32_1 = arith.constant 0 : i32
    return %c0_i32, %c0_i32_0 : i32, i32
  }
  func.func @transform_3(%arg0: i32) -> (i32, i32) {
    %c0_i32 = arith.constant 0 : i32
    %c0_i32_0 = arith.constant 0 : i32
    %c0_i32_1 = arith.constant 0 : i32
    return %c0_i32, %c0_i32_0 : i32, i32
  }
  func.func @transform_4(%arg0: i32) -> (i32, i32, i32) {
    %c0_i32 = arith.constant 0 : i32
    %c0_i32_0 = arith.constant 0 : i32
    %c0_i32_1 = arith.constant 0 : i32
    return %arg0, %c0_i32, %c0_i32_0 : i32, i32, i32
  }
}

</mosaic_0001>

<llo_original>
// kernel: tile.8
$region0: #{tile.8}
  #allocation2 [shape = 's32[1]{0}', space=sflag, size = 0x4, scoped, tag = 'scoped memory for tile.8']
  %s0 = inlined_call_operand.hbm [shape: f32[4], index: 0, kind: input, shape index: {}]
  %s1 = inlined_call_operand.vmem [shape: f32[4,4], index: 1, kind: output, shape index: {}]
  $region1: #{tile.8} parent=0
    #allocation0 [shape = 'u8[512]{0}', space=vmem, size = 0x400, scoped, tag = 'operand span for operand 0']
    #allocation1 [shape = 's32[1]{0}', space=sflag, size = 0x4, scoped, tag = 'scoped memory for tile.8']
    %2 = vsyncpa [#allocation1], 0
    // Predicated region
    $region2: #{tile.8} parent=1 // pred_check
      _
    $region3: #{tile.8} parent=1 // pred_check_branch
      %4 = sbr.rel (0) target = $region5
    $region4: #{tile.8} parent=1 // pred_region
      %s6 = ssub.s32 16, 16
      %7 = vsyncadd [#allocation1], %s6
      %s9 = sshll.u32 [#allocation0], 4
      %s10 = int_to_ptr.vmem [resolvable:$true] %s9
      %12 = dma.hbm_to_vmem [thread:$0]  %s0, 16, %s10, [#allocation1]
    $region5: #{tile.8} parent=1 // pred_fallthru
      _
    // Predicated region
    $region6: #{tile.8} parent=1 // pred_check
      _
    $region7: #{tile.8} parent=1 // pred_check_branch
      %14 = sbr.rel (0) target = $region9
    $region8: #{tile.8} parent=1 // pred_region
      %15 = dma.done [#allocation1], 16
    $region9: #{tile.8} parent=1 // pred_fallthru
      _
    %v16 = vld [vmem:[#allocation0] ss:$0 sm:$0xff]
    %17 = vst [vmem:[%s1] sm:$0xf] %v16
    %18 = vsyncpa [#allocation1], 1

// kernel: tile.0
$region0: #{tile.0}
  %s0 = inlined_call_operand.vmem [shape: f32[4,4], index: 0, kind: input, shape index: {}]
  %s1 = inlined_call_operand.vmem [shape: f32[16,1], index: 1, kind: output, shape index: {}]
  $region1: #{tile.0} parent=0
    #allocation0 [shape = 'u8[4096]{0}', space=vmem, size = 0x1000, scoped, tag = 'scoped mem for input reshape']
    %s3 = sshll.u32 1, 4
    %s4 = ssub.s32 %s3, 1
    %v5 = vld [vmem:[%s0] sm:%s4]
    %6 = vst [vmem:[#allocation0] sm:%s4] %v5
    %v7 = vld [vmem:[#allocation0] sm:$0xf]
    %vm8 = vcmask 7168
    %9 = vst.msk [vmem:[%s1] ss:$4 sm:$0xf] %vm8, %v7
    %v10 = vld [vmem:[#allocation0] sm:$0xf]
    %11 = vrot.lane.b32.xlu0 %v10, 127
    %v12 = vpop.permute.xlu0 %11
    %vm13 = vcmask 7168
    %s14 = scalar_lea.vmem %s1, 1
    %15 = vst.msk [vmem:[%s14] ss:$4 sm:$0xf] %vm13, %v12
    %v16 = vld [vmem:[#allocation0] sm:$0xf]
    %17 = vrot.lane.b32.xlu0 %v16, 126
    %v18 = vpop.permute.xlu0 %17
    %vm19 = vcmask 7168
    %s20 = scalar_lea.vmem %s1, 2
    %21 = vst.msk [vmem:[%s20] ss:$4 sm:$0xf] %vm19, %v18
    %v22 = vld [vmem:[#allocation0] sm:$0xf]
    %23 = vrot.lane.b32.xlu0 %v22, 125
    %v24 = vpop.permute.xlu0 %23
    %vm25 = vcmask 7168
    %s26 = scalar_lea.vmem %s1, 3
    %27 = vst.msk [vmem:[%s26] ss:$4 sm:$0xf] %vm25, %v24

// kernel: hnet_upsample_block_forward.1
$region0: #{hnet_upsample_block_forward.1}
  #allocation0 [shape = 'u32[]', space=smem, size = 0x4, offset = 0x4, fixed_abs, tag = 'smem constant byte address 0x4 - core index']
  #allocation1 [shape = 'u32[144,128]{1,0:T(1,128)}', space=vmem, size = 0x12000, scoped, tag = 'internal scratch']
  #allocation2 [shape = 'f32[72,256]{1,0:T(8,128)}', space=vmem, size = 0x12000, scoped, tag = 'scratch operand']
  %s0 = inlined_call_operand.vmem [shape: f32[2,2,4,290], index: 0, kind: input, shape index: {}]
  %s1 = inlined_call_operand.vmem [shape: bf16[32,72], index: 1, kind: input, shape index: {}]
  %s2 = inlined_call_operand.vmem [shape: f32[16,16], index: 2, kind: input, shape index: {}]
  %s3 = inlined_call_operand.vmem [shape: f32[16,1], index: 3, kind: input, shape index: {}]
  %s4 = inlined_call_operand.vmem [shape: f32[2,32,256], index: 4, kind: output, shape index: {}]
  %s5 = sld [smem:[#allocation0]]
  $region75: #{hnet_upsample_block_forward.1} parent=0
    _
  %s7 = ssub.s32 1, %s5
  %s8 = scalar_select 0, %s7, %s5
  $region1: #{hnet_upsample_block_forward.1} parent=0
    #allocation3 [shape = 'u8[24576]{0}', space=vmem, size = 0x6000, scoped, tag = 'input window, operand 0']
    loop: start=0, step=1, limit=4
    $region2: #{hnet_upsample_block_forward.1} parent=1 // loop_pre_header
      _
    $region3: #{hnet_upsample_block_forward.1} parent=1 // loop_header
      %s10 = sphi 0, %s14
      %p11 = scmp.ge.s32.totalorder %s10, 4
      %s20 = sphi 0, %s22
      %s23 = sphi 0, %s20
      %s24 = sphi 0, %s23
      %s40 = sphi 0, %s24
      %s44 = sphi 0, %s44
      %s46 = sphi 0, %s44
      %s47 = sphi 0, %s46
      %s61 = sphi 0, %s47
      %s65 = sphi 0, %s65
      %s67 = sphi 0, %s65
      %s68 = sphi 0, %s67
      %s82 = sphi 0, %s68
      %s86 = sphi 0, %s86
      %s88 = sphi 0, %s86
      %s89 = sphi 0, %s88
      %s103 = sphi 0, %s89
      %s109 = sphi 0, %s111
      %s112 = sphi 0, %s109
      %s113 = sphi 0, %s112
      %s129 = sphi 0, %s113
    $region4: #{hnet_upsample_block_forward.1} parent=1 // loop_header_branch
      %13 = sbr.rel (%p11) target = $region8
    $region5: #{hnet_upsample_block_forward.1} parent=1 // loop_body
      %s15 = ssub.s32 %s10, 1
      %s16 = ssub.s32 %s10, 2
      %s17 = sadd.s32 %s10, 1
      %s18 = ssub.s32 %s10, %s17
      %p19 = scmp.eq.s32.totalorder %s18, 0
      %s21 = sadd.s32 %s20, 1
      %s22 = scalar_select %p19, %s20, %s21
      %p25 = pneg %p19
      %p26 = scmp.eq.s32.totalorder %s10, 1
      %p27 = por %p25, %p26
      %p28 = scmp.ne.s32.totalorder %s20, %s23
      %p29 = scmp.eq.s32.totalorder %s10, 0
      %p30 = por %p28, %p29
      %p31 = scmp.ne.s32.totalorder %s20, %s23
      %p32 = scmp.eq.s32.totalorder %s15, 1
      %p33 = por %p31, %p32
      %p34 = scmp.ne.s32.totalorder %s23, %s24
      %p35 = scmp.eq.s32.totalorder %s15, 0
      %p36 = por %p34, %p35
      %p37 = scmp.ne.s32.totalorder %s23, %s24
      %p38 = scmp.eq.s32.totalorder %s16, 1
      %p39 = por %p37, %p38
      %p41 = scmp.ne.s32.totalorder %s24, %s40
      %p42 = scmp.eq.s32.totalorder %s16, 0
      %p43 = por %p41, %p42
      %s45 = sadd.s32 %s44, 1
      %p48 = scmp.eq.s32.totalorder %s10, 1
      %p49 = scmp.ne.s32.totalorder %s44, %s46
      %p50 = scmp.eq.s32.totalorder %s10, 0
      %p51 = por %p49, %p50
      %p52 = scmp.ne.s32.totalorder %s44, %s46
      %p53 = scmp.eq.s32.totalorder %s15, 1
      %p54 = por %p52, %p53
      %p55 = scmp.ne.s32.totalorder %s46, %s47
      %p56 = scmp.eq.s32.totalorder %s15, 0
      %p57 = por %p55, %p56
      %p58 = scmp.ne.s32.totalorder %s46, %s47
      %p59 = scmp.eq.s32.totalorder %s16, 1
      %p60 = por %p58, %p59
      %p62 = scmp.ne.s32.totalorder %s47, %s61
      %p63 = scmp.eq.s32.totalorder %s16, 0
      %p64 = por %p62, %p63
      %s66 = sadd.s32 %s65, 1
      %p69 = scmp.eq.s32.totalorder %s10, 1
      %p70 = scmp.ne.s32.totalorder %s65, %s67
      %p71 = scmp.eq.s32.totalorder %s10, 0
      %p72 = por %p70, %p71
      %p73 = scmp.ne.s32.totalorder %s65, %s67
      %p74 = scmp.eq.s32.totalorder %s15, 1
      %p75 = por %p73, %p74
      %p76 = scmp.ne.s32.totalorder %s67, %s68
      %p77 = scmp.eq.s32.totalorder %s15, 0
      %p78 = por %p76, %p77
      %p79 = scmp.ne.s32.totalorder %s67, %s68
      %p80 = scmp.eq.s32.totalorder %s16, 1
      %p81 = por %p79, %p80
      %p83 = scmp.ne.s32.totalorder %s68, %s82
      %p84 = scmp.eq.s32.totalorder %s16, 0
      %p85 = por %p83, %p84
      %s87 = sadd.s32 %s86, 1
      %p90 = scmp.eq.s32.totalorder %s10, 1
      %p91 = scmp.ne.s32.totalorder %s86, %s88
      %p92 = scmp.eq.s32.totalorder %s10, 0
      %p93 = por %p91, %p92
      %p94 = scmp.ne.s32.totalorder %s86, %s88
      %p95 = scmp.eq.s32.totalorder %s15, 1
      %p96 = por %p94, %p95
      %p97 = scmp.ne.s32.totalorder %s88, %s89
      %p98 = scmp.eq.s32.totalorder %s15, 0
      %p99 = por %p97, %p98
      %p100 = scmp.ne.s32.totalorder %s88, %s89
      %p101 = scmp.eq.s32.totalorder %s16, 1
      %p102 = por %p100, %p101
      %p104 = scmp.ne.s32.totalorder %s89, %s103
      %p105 = scmp.eq.s32.totalorder %s16, 0
      %p106 = por %p104, %p105
      %s107 = ssub.s32 %s10, %s17
      %p108 = scmp.eq.s32.totalorder %s107, 0
      %s110 = sadd.s32 %s109, 1
      %s111 = scalar_select %p108, %s109, %s110
      %p114 = pneg %p108
      %p115 = scmp.eq.s32.totalorder %s10, 1
      %p116 = por %p114, %p115
      %p117 = scmp.ne.s32.totalorder %s109, %s112
      %p118 = scmp.eq.s32.totalorder %s10, 0
      %p119 = por %p117, %p118
      %p120 = scmp.ne.s32.totalorder %s109, %s112
      %p121 = scmp.eq.s32.totalorder %s15, 1
      %p122 = por %p120, %p121
      %p123 = scmp.ne.s32.totalorder %s112, %s113
      %p124 = scmp.eq.s32.totalorder %s15, 0
      %p125 = por %p123, %p124
      %p126 = scmp.ne.s32.totalorder %s112, %s113
      %p127 = scmp.eq.s32.totalorder %s16, 1
      %p128 = por %p126, %p127
      %p130 = scmp.ne.s32.totalorder %s113, %s129
      %p131 = scmp.eq.s32.totalorder %s16, 0
      %p132 = por %p130, %p131
      %p133 = scmp.le.s32.totalorder 1, %s10
      %p134 = scmp.lt.s32.totalorder %s10, 3
      %p135 = pnand %p133, %p134
      %p136 = pneg %p135
      // Predicated region
      $region9: #{hnet_upsample_block_forward.1} parent=5 // pred_check
        _
      $region10: #{hnet_upsample_block_forward.1} parent=5 // pred_check_branch
        %138 = sbr.rel (%p135) target = $region12
      $region11: #{hnet_upsample_block_forward.1} parent=5 // pred_region
        %s139 = ssub.s32 %s10, 1
        // Predicated region
        $region13: #{hnet_upsample_block_forward.1} parent=11 // pred_check
          %p140 = pneg %p57
        $region14: #{hnet_upsample_block_forward.1} parent=11 // pred_check_branch
          %142 = sbr.rel (%p140) target = $region16
        $region15: #{hnet_upsample_block_forward.1} parent=11 // pred_region
          _
        $region16: #{hnet_upsample_block_forward.1} parent=11 // pred_fallthru
          _
        // Predicated region
        $region17: #{hnet_upsample_block_forward.1} parent=11 // pred_check
          %p143 = pneg %p78
        $region18: #{hnet_upsample_block_forward.1} parent=11 // pred_check_branch
          %145 = sbr.rel (%p143) target = $region20
        $region19: #{hnet_upsample_block_forward.1} parent=11 // pred_region
          _
        $region20: #{hnet_upsample_block_forward.1} parent=11 // pred_fallthru
          _
        // Predicated region
        $region21: #{hnet_upsample_block_forward.1} parent=11 // pred_check
          %p146 = pneg %p99
        $region22: #{hnet_upsample_block_forward.1} parent=11 // pred_check_branch
          %148 = sbr.rel (%p146) target = $region24
        $region23: #{hnet_upsample_block_forward.1} parent=11 // pred_region
          _
        $region24: #{hnet_upsample_block_forward.1} parent=11 // pred_fallthru
          _
      $region12: #{hnet_upsample_block_forward.1} parent=5 // pred_fallthru
        _
      %p149 = scmp.lt.s32.totalorder %s10, 2
      // Predicated region
      $region25: #{hnet_upsample_block_forward.1} parent=5 // pred_check
        %p150 = pneg %p149
      $region26: #{hnet_upsample_block_forward.1} parent=5 // pred_check_branch
        %152 = sbr.rel (%p150) target = $region28
      $region27: #{hnet_upsample_block_forward.1} parent=5 // pred_region
        // Predicated region
        $region29: #{hnet_upsample_block_forward.1} parent=27 // pred_check
          %p153 = pneg %p30
        $region30: #{hnet_upsample_block_forward.1} parent=27 // pred_check_branch
          %155 = sbr.rel (%p153) target = $region32
        $region31: #{hnet_upsample_block_forward.1} parent=27 // pred_region
          %s156 = sand.u32 %s20, 1
          %s157 = sand.u32 %s20, 1
          %s158 = smul.addr %s157, 24
          %s159 = scalar_lea.vmem [#allocation3], %s158
          %s160 = smul.addr %s10, 3
          %s161 = smul.addr %s160, 4
          %s162 = scalar_lea.vmem %s0, %s161
          // Predicated region
          $region33: #{hnet_upsample_block_forward.1} parent=31 // pred_check
            _
          $region34: #{hnet_upsample_block_forward.1} parent=31 // pred_check_branch
            %164 = sbr.rel (0) target = $region36
          $region35: #{hnet_upsample_block_forward.1} parent=31 // pred_region
            // Predicated region
            $region37: #{hnet_upsample_block_forward.1} parent=35 // pred_check
              _
            $region38: #{hnet_upsample_block_forward.1} parent=35 // pred_check_branch
              %166 = sbr.rel (0) target = $region40
            $region39: #{hnet_upsample_block_forward.1} parent=35 // pred_region
              %s167 = scalar_lea.vmem %s162, 8
              %s168 = scalar_lea.vmem %s159, 8 [#allocation3]
              loop: start=0, step=1, limit=1
              $region41: #{hnet_upsample_block_forward.1} parent=39 // loop_pre_header
                _
              $region42: #{hnet_upsample_block_forward.1} parent=39 // loop_header
                %s170 = sphi 0, %s174
                %p171 = scmp.ge.s32.totalorder %s170, 1
                %s175 = sphi %s162, %s162
                %s176 = sphi %s159, %s159
              $region43: #{hnet_upsample_block_forward.1} parent=39 // loop_header_branch
                %173 = sbr.rel (%p171) target = $region47
              $region44: #{hnet_upsample_block_forward.1} parent=39 // loop_body
                %v177 = vld [vmem:[%s175] sm:$0xff]
                %178 = vst [vmem:[%s176] sm:$0xff] %v177
                %v179 = vld [vmem:[%s175 + $0x18] sm:$0xff]
                %180 = vst [vmem:[%s176 + $0xc] sm:$0xff] %v179
              $region45: #{hnet_upsample_block_forward.1} parent=39 // loop_footer
                %s174 = sadd.s32 1, %s170
              $region46: #{hnet_upsample_block_forward.1} parent=39 // loop_footer_branch
                %169 = sbr.rel target = $region42
              $region47: #{hnet_upsample_block_forward.1} parent=39 // loop_exit
                _
              %s182 = ssub.s32 16, 1
              loop: start=0, step=1, limit=1
              $region48: #{hnet_upsample_block_forward.1} parent=39 // loop_pre_header
                _
              $region49: #{hnet_upsample_block_forward.1} parent=39 // loop_header
                %s184 = sphi 0, %s188
                %p185 = scmp.ge.s32.totalorder %s184, 1
                %s189 = sphi %s167, %s167
                %s190 = sphi %s168, %s168
              $region50: #{hnet_upsample_block_forward.1} parent=39 // loop_header_branch
                %187 = sbr.rel (%p185) target = $region54
              $region51: #{hnet_upsample_block_forward.1} parent=39 // loop_body
                %v191 = vld [vmem:[%s189] sm:%s182]
                %192 = vst [vmem:[%s190] sm:%s182] %v191
                %v193 = vld [vmem:[%s189 + $0x18] sm:%s182]
                %194 = vst [vmem:[%s190 + $0xc] sm:%s182] %v193
              $region52: #{hnet_upsample_block_forward.1} parent=39 // loop_footer
                %s188 = sadd.s32 1, %s184
              $region53: #{hnet_upsample_block_forward.1} parent=39 // loop_footer_branch
                %183 = sbr.rel target = $region49
              $region54: #{hnet_upsample_block_forward.1} parent=39 // loop_exit
                _
            $region40: #{hnet_upsample_block_forward.1} parent=35 // pred_fallthru
              _
          $region36: #{hnet_upsample_block_forward.1} parent=31 // pred_fallthru
            _
          %195 = vnop
        $region32: #{hnet_upsample_block_forward.1} parent=27 // pred_fallthru
          _
      $region28: #{hnet_upsample_block_forward.1} parent=5 // pred_fallthru
        _
      %p196 = scmp.le.s32.totalorder 1, %s10
      %p197 = scmp.lt.s32.totalorder %s10, 3
      %p198 = pnand %p196, %p197
      %p199 = pneg %p198
      // Predicated region
      $region55: #{hnet_upsample_block_forward.1} parent=5 // pred_check
        _
      $region56: #{hnet_upsample_block_forward.1} parent=5 // pred_check_branch
        %201 = sbr.rel (%p198) target = $region58
      $region57: #{hnet_upsample_block_forward.1} parent=5 // pred_region
        %s202 = ssub.s32 %s10, 1
        %s203 = sand.u32 %s23, 1
        %s204 = sand.u32 %s23, 1
        %s205 = smul.addr %s204, 24
        %s206 = scalar_lea.vmem [#allocation3], %s205
        // Predicated region
        $region59: #{hnet_upsample_block_forward.1} parent=57 // pred_check
          %p207 = pneg %p36
        $region60: #{hnet_upsample_block_forward.1} parent=57 // pred_check_branch
          %209 = sbr.rel (%p207) target = $region62
        $region61: #{hnet_upsample_block_forward.1} parent=57 // pred_region
          _
        $region62: #{hnet_upsample_block_forward.1} parent=57 // pred_fallthru
          _
        %s210 = sand.u32 %s23, 1
        %s211 = sand.u32 %s23, 1
        %s212 = smul.addr %s211, 24
        %s213 = scalar_lea.vmem [#allocation3], %s212
        %p214 = pneg %p36
        %p215 = pneg %p33
        %p216 = pneg %p57
        %p217 = pneg %p54
        %p218 = pneg %p78
        %p219 = pneg %p75
        %p220 = pneg %p99
        %p221 = pneg %p96
        %p222 = pneg %p125
        %p223 = pneg %p122
        %p224 = scmp.lt.s32.totalorder %s15, 1
        %s225 = scalar_select %p224, %s15, 1
        %s226 = smul.addr %s225, 8
        %s227 = smul.addr %s226, 8
        %s228 = scalar_lea.vmem %s4, %s227
        %p229 = scmp.lt.s32.totalorder %s15, 1
        %s230 = scalar_select %p229, %s15, 1
        %s231 = smul.addr %s230, 8
        %s232 = smul.addr %s231, 8
        %s233 = scalar_lea.vmem %s4, %s232
        %v235 = vlaneseq
        %v236 = vand.u32 %v235, 127
        %v237 = vadd.s32 %v236, 128
        %vm238 = vcmp.lt.s32.totalorder %v236, 0
        %v239 = vsub.s32 0, %v236
        %v240 = vsel %vm238, %v239, %v236
        %v241 = vshrl.u32 %v240, 4
        %v242 = vand.u32 %v240, 15
        %v243 = vsub.s32 0, %v242
        %v244 = vsel %vm238, %v243, %v242
        %vm245 = vcmp.lt.s32.totalorder %v237, 0
        %v246 = vsub.s32 0, %v237
        %v247 = vsel %vm245, %v246, %v237
        %v248 = vshrl.u32 %v247, 4
        %v249 = vand.u32 %v247, 15
        %v250 = vsub.s32 0, %v249
        %v251 = vsel %vm245, %v250, %v249
        %vm252 = vcmp.ne.s32.totalorder %v244, 0
        %vm253 = vcmp.ne.s32.totalorder %v251, 0
        %vm254 = vcmp.lt.s32.totalorder %v244, 0
        %vm255 = vcmp.lt.s32.totalorder %v251, 0
        %vm256 = vmand %vm254, %vm252
        %vm257 = vmand %vm255, %vm253
        %v258 = vadd.s32 %v244, 16
        %v259 = vadd.s32 %v251, 16
        %v260 = vsel %vm256, %v258, %v244
        %v261 = vsel %vm257, %v259, %v251
        %vm262 = vcmp.ge.s32.totalorder %v260, 1
        %vm263 = vcmp.ge.s32.totalorder %v261, 1
        %v264 = vsel %vm262, 1, 0
        %v265 = vsel %vm263, 1, 0
        %v266 = vcvt.s32.f32 %v264
        %v267 = vcvt.s32.f32 %v265
        %vm268 = vcmp.le.s32.totalorder %v260, 14
        %vm269 = vcmp.le.s32.totalorder %v261, 14
        %v270 = vsel %vm268, 1, 0
        %v271 = vsel %vm269, 1, 0
        %v272 = vcvt.s32.f32 %v270
        %v273 = vcvt.s32.f32 %v271
        %v274 = vld [vmem:[%s206] sm:$0xff]
        %v277 = vcombine.low %v266, %v267
        %v279 = vmul.f32 %v274, %v277
        %v281 = vcombine.high %v279, %v279
        %283 = vst [vmem:[#allocation2] sm:$0xf] %v279
        %284 = vst [vmem:[#allocation2 + $0x8] sm:$0xf] %v281
        %s285 = scalar_lea.vmem %s206, 12 [#allocation3]
        %v286 = vld [vmem:[%s285] sm:$0xff]
        %v287 = vmul.f32 %v286, %v277
        %v289 = vcombine.low %v287, %v287
        %291 = vst [vmem:[#allocation2] sm:$0xf0] %v289
        %292 = vst [vmem:[#allocation2 + $0x8] sm:$0xf0] %v287
        %v293 = vld [vmem:[%s206] sm:$0xff]
        %v294 = vld [vmem:[%s206 + $0x8] sm:$0xf]
        %v297 = vcombine.high %v293, %v293
        %298 = vrot.lane.b32.xlu0 %v293, 127
        %v299 = vpop.permute.xlu0 %298
        %300 = vrot.lane.b32.xlu0 %v297, 127
        %v301 = vpop.permute.xlu0 %300
        %302 = vrot.lane.b32.xlu0 %v294, 127
        %v303 = vpop.permute.xlu0 %302
        %vm304 = vcmask 1039360
        %v305 = vsel %vm304, %v299, %v301
        %v306 = vsel %vm304, %v301, %v303
        %309 = vst [vmem:[#allocation2 + $0x10] sm:$0xf] %v305
        %310 = vst [vmem:[#allocation2 + $0x18] sm:$0xf] %v306
        %v311 = vld [vmem:[%s285] sm:$0xff]
        %v312 = vld [vmem:[%s285 + $0x8] sm:$0xf]
        %v315 = vcombine.low %v311, %v311
        %v316 = vcombine.low %v312, %v312
        %317 = vrot.lane.b32.xlu0 %v315, 127
        %v318 = vpop.permute.xlu0 %317
        %319 = vrot.lane.b32.xlu0 %v311, 127
        %v320 = vpop.permute.xlu0 %319
        %321 = vrot.lane.b32.xlu0 %v316, 127
        %v322 = vpop.permute.xlu0 %321
        %v323 = vsel %vm304, %v318, %v320
        %v324 = vsel %vm304, %v320, %v322
        %327 = vst [vmem:[#allocation2 + $0x10] sm:$0xf0] %v323
        %328 = vst [vmem:[#allocation2 + $0x18] sm:$0xf0] %v324
        %v329 = vld [vmem:[%s206] sm:$0xff]
        %v330 = vld [vmem:[%s206 + $0x8] sm:$0xf]
        %v333 = vcombine.low %v272, %v273
        %334 = vrot.lane.b32.xlu0 %v333, 2
        %v335 = vpop.permute.xlu0 %334
        %v336 = vrot.slane %v335, 4
        %vm337 = vcmask 15360
        %v338 = vsel %vm337, %v336, %v335
        %v341 = vmul.f32 %v329, %v338
        %v342 = vmul.f32 %v330, %v336
        %v345 = vcombine.high %v341, %v341
        %346 = vrot.lane.b32.xlu0 %v341, 126
        %v347 = vpop.permute.xlu0 %346
        %348 = vrot.lane.b32.xlu0 %v345, 126
        %v349 = vpop.permute.xlu0 %348
        %350 = vrot.lane.b32.xlu0 %v342, 126
        %v351 = vpop.permute.xlu0 %350
        %vm352 = vcmask 1031168
        %v353 = vsel %vm352, %v347, %v349
        %v354 = vsel %vm352, %v349, %v351
        %357 = vst [vmem:[#allocation2 + $0x20] sm:$0xf] %v353
        %358 = vst [vmem:[#allocation2 + $0x28] sm:$0xf] %v354
        %v359 = vld [vmem:[%s285] sm:$0xff]
        %v360 = vld [vmem:[%s285 + $0x8] sm:$0xf]
        %v361 = vmul.f32 %v359, %v338
        %v362 = vmul.f32 %v360, %v336
        %v365 = vcombine.low %v361, %v361
        %v366 = vcombine.low %v362, %v362
        %367 = vrot.lane.b32.xlu0 %v365, 126
        %v368 = vpop.permute.xlu0 %367
        %369 = vrot.lane.b32.xlu0 %v361, 126
        %v370 = vpop.permute.xlu0 %369
        %371 = vrot.lane.b32.xlu0 %v366, 126
        %v372 = vpop.permute.xlu0 %371
        %v373 = vsel %vm352, %v368, %v370
        %v374 = vsel %vm352, %v370, %v372
        %377 = vst [vmem:[#allocation2 + $0x20] sm:$0xf0] %v373
        %378 = vst [vmem:[#allocation2 + $0x28] sm:$0xf0] %v374
        %v379 = vld [vmem:[%s206] sm:$0xff]
        %v380 = vld [vmem:[%s206 + $0x8] sm:$0xf]
        %381 = vrot.lane.b32.xlu0 %v277, 16
        %v382 = vpop.permute.xlu0 %381
        %v383 = vrot.slane %v382, 4
        %vm384 = vcmask 130048
        %v385 = vsel %vm384, %v383, %v382
        %v388 = vmul.f32 %v379, %v385
        %v389 = vmul.f32 %v380, %v383
        %v392 = vcombine.high %v388, %v388
        %393 = vrot.lane.b32.xlu0 %v388, 112
        %v394 = vpop.permute.xlu0 %393
        %395 = vrot.lane.b32.xlu0 %v392, 112
        %v396 = vpop.permute.xlu0 %395
        %397 = vrot.lane.b32.xlu0 %v389, 112
        %v398 = vpop.permute.xlu0 %397
        %vm399 = vcmask 916480
        %v400 = vsel %vm399, %v394, %v396
        %v401 = vsel %vm399, %v396, %v398
        %404 = vst [vmem:[#allocation2 + $0x30] sm:$0xf] %v400
        %405 = vst [vmem:[#allocation2 + $0x38] sm:$0xf] %v401
        %v406 = vld [vmem:[%s285] sm:$0xff]
        %v407 = vld [vmem:[%s285 + $0x8] sm:$0xf]
        %v408 = vmul.f32 %v406, %v385
        %v409 = vmul.f32 %v407, %v383
        %v412 = vcombine.low %v408, %v408
        %v413 = vcombine.low %v409, %v409
        %414 = vrot.lane.b32.xlu0 %v412, 112
        %v415 = vpop.permute.xlu0 %414
        %416 = vrot.lane.b32.xlu0 %v408, 112
        %v417 = vpop.permute.xlu0 %416
        %418 = vrot.lane.b32.xlu0 %v413, 112
        %v419 = vpop.permute.xlu0 %418
        %v420 = vsel %vm399, %v415, %v417
        %v421 = vsel %vm399, %v417, %v419
        %424 = vst [vmem:[#allocation2 + $0x30] sm:$0xf0] %v420
        %425 = vst [vmem:[#allocation2 + $0x38] sm:$0xf0] %v421
        %v426 = vld [vmem:[%s206] sm:$0xff]
        %v427 = vld [vmem:[%s206 + $0x8] sm:$0xf]
        %v430 = vcombine.high %v426, %v426
        %431 = vrot.lane.b32.xlu0 %v426, 111
        %v432 = vpop.permute.xlu0 %431
        %433 = vrot.lane.b32.xlu0 %v430, 111
        %v434 = vpop.permute.xlu0 %433
        %435 = vrot.lane.b32.xlu0 %v427, 111
        %v436 = vpop.permute.xlu0 %435
        %vm437 = vcmask 908288
        %v438 = vsel %vm437, %v432, %v434
        %v439 = vsel %vm437, %v434, %v436
        %442 = vst [vmem:[#allocation2 + $0x40] sm:$0xf] %v438
        %443 = vst [vmem:[#allocation2 + $0x48] sm:$0xf] %v439
        %v444 = vld [vmem:[%s285] sm:$0xff]
        %v445 = vld [vmem:[%s285 + $0x8] sm:$0xf]
        %v448 = vcombine.low %v444, %v444
        %v449 = vcombine.low %v445, %v445
        %450 = vrot.lane.b32.xlu0 %v448, 111
        %v451 = vpop.permute.xlu0 %450
        %452 = vrot.lane.b32.xlu0 %v444, 111
        %v453 = vpop.permute.xlu0 %452
        %454 = vrot.lane.b32.xlu0 %v449, 111
        %v455 = vpop.permute.xlu0 %454
        %v456 = vsel %vm437, %v451, %v453
        %v457 = vsel %vm437, %v453, %v455
        %460 = vst [vmem:[#allocation2 + $0x40] sm:$0xf0] %v456
        %461 = vst [vmem:[#allocation2 + $0x48] sm:$0xf0] %v457
        %v462 = vld [vmem:[%s206] sm:$0xff]
        %v463 = vld [vmem:[%s206 + $0x8] sm:$0xf]
        %464 = vrot.lane.b32.xlu0 %v333, 18
        %v465 = vpop.permute.xlu0 %464
        %v466 = vrot.slane %v465, 4
        %vm467 = vcmask 146432
        %v468 = vsel %vm467, %v466, %v465
        %v471 = vmul.f32 %v462, %v468
        %v472 = vmul.f32 %v463, %v466
        %v475 = vcombine.high %v471, %v471
        %476 = vrot.lane.b32.xlu0 %v471, 110
        %v477 = vpop.permute.xlu0 %476
        %478 = vrot.lane.b32.xlu0 %v475, 110
        %v479 = vpop.permute.xlu0 %478
        %480 = vrot.lane.b32.xlu0 %v472, 110
        %v481 = vpop.permute.xlu0 %480
        %vm482 = vcmask 900096
        %v483 = vsel %vm482, %v477, %v479
        %v484 = vsel %vm482, %v479, %v481
        %487 = vst [vmem:[#allocation2 + $0x50] sm:$0xf] %v483
        %488 = vst [vmem:[#allocation2 + $0x58] sm:$0xf] %v484
        %v489 = vld [vmem:[%s285] sm:$0xff]
        %v490 = vld [vmem:[%s285 + $0x8] sm:$0xf]
        %v491 = vmul.f32 %v489, %v468
        %v492 = vmul.f32 %v490, %v466
        %v495 = vcombine.low %v491, %v491
        %v496 = vcombine.low %v492, %v492
        %497 = vrot.lane.b32.xlu0 %v495, 110
        %v498 = vpop.permute.xlu0 %497
        %499 = vrot.lane.b32.xlu0 %v491, 110
        %v500 = vpop.permute.xlu0 %499
        %501 = vrot.lane.b32.xlu0 %v496, 110
        %v502 = vpop.permute.xlu0 %501
        %v503 = vsel %vm482, %v498, %v500
        %v504 = vsel %vm482, %v500, %v502
        %507 = vst [vmem:[#allocation2 + $0x50] sm:$0xf0] %v503
        %508 = vst [vmem:[#allocation2 + $0x58] sm:$0xf0] %v504
        %v509 = vld [vmem:[%s206] sm:$0xff]
        %v510 = vld [vmem:[%s206 + $0x8] sm:$0xf]
        %511 = vrot.lane.b32.xlu0 %v277, 32
        %v512 = vpop.permute.xlu0 %511
        %v513 = vrot.slane %v512, 4
        %vm514 = vcmask 261120
        %v515 = vsel %vm514, %v513, %v512
        %v518 = vmul.f32 %v509, %v515
        %v519 = vmul.f32 %v510, %v513
        %v522 = vcombine.high %v518, %v518
        %523 = vrot.lane.b32.xlu0 %v518, 96
        %v524 = vpop.permute.xlu0 %523
        %525 = vrot.lane.b32.xlu0 %v522, 96
        %v526 = vpop.permute.xlu0 %525
        %527 = vrot.lane.b32.xlu0 %v519, 96
        %v528 = vpop.permute.xlu0 %527
        %vm529 = vcmask 785408
        %v530 = vsel %vm529, %v524, %v526
        %v531 = vsel %vm529, %v526, %v528
        %534 = vst [vmem:[#allocation2 + $0x60] sm:$0xf] %v530
        %535 = vst [vmem:[#allocation2 + $0x68] sm:$0xf] %v531
        %v536 = vld [vmem:[%s285] sm:$0xff]
        %v537 = vld [vmem:[%s285 + $0x8] sm:$0xf]
        %v538 = vmul.f32 %v536, %v515
        %v539 = vmul.f32 %v537, %v513
        %v542 = vcombine.low %v538, %v538
        %v543 = vcombine.low %v539, %v539
        %544 = vrot.lane.b32.xlu0 %v542, 96
        %v545 = vpop.permute.xlu0 %544
        %546 = vrot.lane.b32.xlu0 %v538, 96
        %v547 = vpop.permute.xlu0 %546
        %548 = vrot.lane.b32.xlu0 %v543, 96
        %v549 = vpop.permute.xlu0 %548
        %v550 = vsel %vm529, %v545, %v547
        %v551 = vsel %vm529, %v547, %v549
        %554 = vst [vmem:[#allocation2 + $0x60] sm:$0xf0] %v550
        %555 = vst [vmem:[#allocation2 + $0x68] sm:$0xf0] %v551
        %v556 = vld [vmem:[%s206] sm:$0xff]
        %v557 = vld [vmem:[%s206 + $0x8] sm:$0xf]
        %v560 = vcombine.high %v556, %v556
        %561 = vrot.lane.b32.xlu0 %v556, 95
        %v562 = vpop.permute.xlu0 %561
        %563 = vrot.lane.b32.xlu0 %v560, 95
        %v564 = vpop.permute.xlu0 %563
        %565 = vrot.lane.b32.xlu0 %v557, 95
        %v566 = vpop.permute.xlu0 %565
        %vm567 = vcmask 777216
        %v568 = vsel %vm567, %v562, %v564
        %v569 = vsel %vm567, %v564, %v566
        %572 = vst [vmem:[#allocation2 + $0x70] sm:$0xf] %v568
        %573 = vst [vmem:[#allocation2 + $0x78] sm:$0xf] %v569
        %v574 = vld [vmem:[%s285] sm:$0xff]
        %v575 = vld [vmem:[%s285 + $0x8] sm:$0xf]
        %v578 = vcombine.low %v574, %v574
        %v579 = vcombine.low %v575, %v575
        %580 = vrot.lane.b32.xlu0 %v578, 95
        %v581 = vpop.permute.xlu0 %580
        %582 = vrot.lane.b32.xlu0 %v574, 95
        %v583 = vpop.permute.xlu0 %582
        %584 = vrot.lane.b32.xlu0 %v579, 95
        %v585 = vpop.permute.xlu0 %584
        %v586 = vsel %vm567, %v581, %v583
        %v587 = vsel %vm567, %v583, %v585
        %590 = vst [vmem:[#allocation2 + $0x70] sm:$0xf0] %v586
        %591 = vst [vmem:[#allocation2 + $0x78] sm:$0xf0] %v587
        %v592 = vld [vmem:[%s206] sm:$0xff]
        %v593 = vld [vmem:[%s206 + $0x8] sm:$0xf]
        %594 = vrot.lane.b32.xlu0 %v333, 34
        %v595 = vpop.permute.xlu0 %594
        %v596 = vrot.slane %v595, 4
        %vm597 = vcmask 277504
        %v598 = vsel %vm597, %v596, %v595
        %v601 = vmul.f32 %v592, %v598
        %v602 = vmul.f32 %v593, %v596
        %v605 = vcombine.high %v601, %v601
        %606 = vrot.lane.b32.xlu0 %v601, 94
        %v607 = vpop.permute.xlu0 %606
        %608 = vrot.lane.b32.xlu0 %v605, 94
        %v609 = vpop.permute.xlu0 %608
        %610 = vrot.lane.b32.xlu0 %v602, 94
        %v611 = vpop.permute.xlu0 %610
        %vm612 = vcmask 769024
        %v613 = vsel %vm612, %v607, %v609
        %v614 = vsel %vm612, %v609, %v611
        %617 = vst [vmem:[#allocation2 + $0x80] sm:$0xf] %v613
        %618 = vst [vmem:[#allocation2 + $0x88] sm:$0xf] %v614
        %v619 = vld [vmem:[%s285] sm:$0xff]
        %v620 = vld [vmem:[%s285 + $0x8] sm:$0xf]
        %v621 = vmul.f32 %v619, %v598
        %v622 = vmul.f32 %v620, %v596
        %v625 = vcombine.low %v621, %v621
        %v626 = vcombine.low %v622, %v622
        %627 = vrot.lane.b32.xlu0 %v625, 94
        %v628 = vpop.permute.xlu0 %627
        %629 = vrot.lane.b32.xlu0 %v621, 94
        %v630 = vpop.permute.xlu0 %629
        %631 = vrot.lane.b32.xlu0 %v626, 94
        %v632 = vpop.permute.xlu0 %631
        %v633 = vsel %vm612, %v628, %v630
        %v634 = vsel %vm612, %v630, %v632
        %637 = vst [vmem:[#allocation2 + $0x80] sm:$0xf0] %v633
        %638 = vst [vmem:[#allocation2 + $0x88] sm:$0xf0] %v634
        %v639 = vld [vmem:[%s1] sm:$0xf]
        %v640 = vld [vmem:[%s1 + $0x4] sm:$0xf]
        %v641 = vld [vmem:[%s1 + $0x8] sm:$0xf]
        %v642 = vld [vmem:[%s1 + $0xc] sm:$0xf]
        %v643 = vld [vmem:[#allocation2] sm:$0xff]
        %v644 = vld [vmem:[#allocation2 + $0x8] sm:$0xff]
        %v645 = vld [vmem:[#allocation2 + $0x10] sm:$0xff]
        %v646 = vld [vmem:[#allocation2 + $0x18] sm:$0xff]
        %v647 = vld [vmem:[#allocation2 + $0x20] sm:$0xff]
        %v648 = vld [vmem:[#allocation2 + $0x28] sm:$0xff]
        %v649 = vld [vmem:[#allocation2 + $0x30] sm:$0xff]
        %v650 = vld [vmem:[#allocation2 + $0x38] sm:$0xff]
        %v651 = vld [vmem:[#allocation2 + $0x40] sm:$0xff]
        %v652 = vld [vmem:[#allocation2 + $0x48] sm:$0xff]
        %v653 = vld [vmem:[#allocation2 + $0x50] sm:$0xff]
        %v654 = vld [vmem:[#allocation2 + $0x58] sm:$0xff]
        %v655 = vld [vmem:[#allocation2 + $0x60] sm:$0xff]
        %v656 = vld [vmem:[#allocation2 + $0x68] sm:$0xff]
        %v657 = vld [vmem:[#allocation2 + $0x70] sm:$0xff]
        %v658 = vld [vmem:[#allocation2 + $0x78] sm:$0xff]
        %v659 = vld [vmem:[#allocation2 + $0x80] sm:$0xff]
        %v660 = vld [vmem:[#allocation2 + $0x88] sm:$0xff]
        %v661 = vpack.c.bf16 %v645, %v643
        %v662 = vpack.c.bf16 %v646, %v644
        %v663 = vpack.c.bf16 %v649, %v647
        %v664 = vpack.c.bf16 %v650, %v648
        %v665 = vpack.c.bf16 %v653, %v651
        %v666 = vpack.c.bf16 %v654, %v652
        %v667 = vpack.c.bf16 %v657, %v655
        %v668 = vpack.c.bf16 %v658, %v656
        %v669 = vpack.c.bf16 %v659, %v659
        %v670 = vpack.c.bf16 %v660, %v660
        %v675 = vunpack.c.l.b16 %v639
        %v676 = vunpack.c.l.b16 %v640
        %v677 = vunpack.c.l.b16 %v641
        %v678 = vunpack.c.l.b16 %v642
        %v679 = vpack.c.b16 %v676, %v675
        %v680 = vpack.c.b16 %v678, %v677
        %vm681 = vcmask 588800
        %v683 = vsel %vm681, %v679, 0
        %v686 = vsel %vm681, %v680, 0
        %vm688 = vcmask 1043456
        %v690 = vsel %vm688, %v669, 0
        %v693 = vsel %vm688, %v670, 0
        %695 = vmatprep.subr.bf16.mxu0 0
        %696 = vmatpush1.bf16.msra.mxu0 0
        %697 = vmatprep.subr.bf16.mxu0 0
        %698 = vmatpush1.bf16.msra.mxu0 0
        %699 = vmatprep.subr.bf16.mxu0 0
        %700 = vmatpush1.bf16.msra.mxu0 0
        %701 = vmatprep.subr.bf16.mxu0 %v693
        %702 = vmatpush1.bf16.msra.mxu0 %v690
        %703 = vmatprep.subr.bf16.mxu0 %v668
        %704 = vmatpush1.bf16.msra.mxu0 %v667
        %705 = vmatprep.subr.bf16.mxu0 %v666
        %706 = vmatpush1.bf16.msra.mxu0 %v665
        %707 = vmatprep.subr.bf16.mxu0 %v664
        %708 = vmatpush1.bf16.msra.mxu0 %v663
        %709 = vmatprep.subr.bf16.mxu0 %v662
        %710 = vmatpush1.bf16.msra.mxu0 %v661
        %711 = vmatprep.subr.bf16.mxu0 0
        %712 = vmatpush2.bf16.msra.mxu0 0
        %713 = vmatprep.subr.bf16.mxu0 0
        %714 = vmatpush2.bf16.msra.mxu0 0
        %715 = vmatprep.subr.bf16.mxu0 0
        %716 = vmatpush2.bf16.msra.mxu0 0
        %717 = vmatprep.subr.bf16.mxu0 0
        %718 = vmatpush2.bf16.msra.mxu0 0
        %719 = vmatprep.subr.bf16.mxu0 0
        %720 = vmatpush2.bf16.msra.mxu0 0
        %721 = vmatprep.subr.bf16.mxu0 0
        %722 = vmatpush2.bf16.msra.mxu0 0
        %723 = vmatprep.subr.bf16.mxu0 0
        %724 = vmatpush2.bf16.msra.mxu0 0
        %725 = vmatprep.subr.bf16.mxu0 0
        %726 = vmatpush2.bf16.msra.mxu0 0
        %727 = vmatprep.mubr.bf16.mxu0 0
        %728 = vmatmul.mubr.bf16.gmra.mxu0 %v683
        %v729 = vpop.f32.mrf.mxu0
        %v730 = vadd.f32 0.0, %v729
        %v731 = vpop.f32.mrf.mxu0
        %v732 = vadd.f32 0.0, %v731
        %v733 = vpop.f32.mrf.mxu0
        %v734 = vadd.f32 0.0, %v733
        %v735 = vpop.f32.mrf.mxu0
        %v736 = vadd.f32 0.0, %v735
        %737 = vmatprep.mubr.bf16.mxu0 0
        %738 = vmatmul.mubr.bf16.gmra.mxu0 %v686
        %v739 = vpop.f32.mrf.mxu0
        %v740 = vadd.f32 0.0, %v739
        %v741 = vpop.f32.mrf.mxu0
        %v742 = vadd.f32 0.0, %v741
        %v743 = vpop.f32.mrf.mxu0
        %v744 = vadd.f32 0.0, %v743
        %v745 = vpop.f32.mrf.mxu0
        %v746 = vadd.f32 0.0, %v745
        %747 = vdwg.mxu0
        %v748 = vmul.f32 %v730, %v730
        %v749 = vmul.f32 %v732, %v732
        %v750 = vmul.f32 %v734, %v734
        %v751 = vmul.f32 %v736, %v736
        %v752 = vmul.f32 %v740, %v740
        %v753 = vmul.f32 %v742, %v742
        %v754 = vmul.f32 %v744, %v744
        %v755 = vmul.f32 %v746, %v746
        %v756 = vadd.f32 %v748, %v752
        %v757 = vadd.f32 %v749, %v753
        %v758 = vadd.f32 %v750, %v754
        %v759 = vadd.f32 %v751, %v755
        %v760 = vrsqrt.pop %v756
        %v761 = vmul.f32 %v756, %v760
        %vm762 = vcmp.eq.f32.partialorder %v756, inf
        %v763 = vsel %vm762, %v756, %v761
        %vm764 = vcmp.eq.f32.partialorder %v756, 0.0
        %v765 = vand.u32 %v756, 2147483648
        %v766 = vsel %vm764, %v765, %v763
        %v767 = vrsqrt.pop %v757
        %v768 = vmul.f32 %v757, %v767
        %vm769 = vcmp.eq.f32.partialorder %v757, inf
        %v770 = vsel %vm769, %v757, %v768
        %vm771 = vcmp.eq.f32.partialorder %v757, 0.0
        %v772 = vand.u32 %v757, 2147483648
        %v773 = vsel %vm771, %v772, %v770
        %v774 = vrsqrt.pop %v758
        %v775 = vmul.f32 %v758, %v774
        %vm776 = vcmp.eq.f32.partialorder %v758, inf
        %v777 = vsel %vm776, %v758, %v775
        %vm778 = vcmp.eq.f32.partialorder %v758, 0.0
        %v779 = vand.u32 %v758, 2147483648
        %v780 = vsel %vm778, %v779, %v777
        %v781 = vrsqrt.pop %v759
        %v782 = vmul.f32 %v759, %v781
        %vm783 = vcmp.eq.f32.partialorder %v759, inf
        %v784 = vsel %vm783, %v759, %v782
        %vm785 = vcmp.eq.f32.partialorder %v759, 0.0
        %v786 = vand.u32 %v759, 2147483648
        %v787 = vsel %vm785, %v786, %v784
        %v788 = vld [vmem:[%s2] sm:$0xff]
        %v789 = vld [vmem:[%s2 + $0x8] sm:$0xff]
        %v790 = vld [vmem:[%s3] sm:$0xff]
        %v791 = vld [vmem:[%s3 + $0x8] sm:$0xff]
        %793 = vset.pattern.permute.xlu0 0
        %794 = vperm.xlu0 %793, %v790
        %v795 = vpop.permute.xlu0 %794
        %798 = vset.pattern.permute.xlu0 0
        %799 = vperm.xlu0 %798, %v791
        %v800 = vpop.permute.xlu0 %799
        %v803 = vsel %vm384, %v788, 0
        %v806 = vsel %vm384, %v789, 0
        %808 = vmatprep.subr.mxu0 0.0
        %809 = vmatpush1.msra.mxu0 0.0
        %810 = vmatprep.subr.mxu0 0.0
        %811 = vmatpush1.msra.mxu0 0.0
        %812 = vmatprep.subr.mxu0 0.0
        %813 = vmatpush1.msra.mxu0 0.0
        %814 = vmatprep.subr.mxu0 0.0
        %815 = vmatpush1.msra.mxu0 0.0
        %816 = vmatprep.subr.mxu0 0.0
        %817 = vmatpush1.msra.mxu0 0.0
        %818 = vmatprep.subr.mxu0 0.0
        %819 = vmatpush1.msra.mxu0 0.0
        %820 = vmatprep.subr.mxu0 0.0
        %821 = vmatpush1.msra.mxu0 0.0
        %822 = vmatprep.subr.mxu0 0.0
        %823 = vmatpush1.msra.mxu0 0.0
        %824 = vmatprep.subr.mxu0 0.0
        %825 = vmatpush1.msra.mxu0 0.0
        %826 = vmatprep.subr.mxu0 0.0
        %827 = vmatpush1.msra.mxu0 0.0
        %828 = vmatprep.subr.mxu0 0.0
        %829 = vmatpush1.msra.mxu0 0.0
        %830 = vmatprep.subr.mxu0 0.0
        %831 = vmatpush1.msra.mxu0 0.0
        %832 = vmatprep.subr.mxu0 0.0
        %833 = vmatpush1.msra.mxu0 0.0
        %834 = vmatprep.subr.mxu0 0.0
        %835 = vmatpush1.msra.mxu0 0.0
        %836 = vmatprep.subr.mxu0 %v787
        %837 = vmatpush1.msra.mxu0 %v780
        %838 = vmatprep.subr.mxu0 %v773
        %839 = vmatpush1.msra.mxu0 %v766
        %840 = vmatprep.subr.mxu0 0.0
        %841 = vmatpush2.msra.mxu0 0.0
        %842 = vmatprep.subr.mxu0 0.0
        %843 = vmatpush2.msra.mxu0 0.0
        %844 = vmatprep.subr.mxu0 0.0
        %845 = vmatpush2.msra.mxu0 0.0
        %846 = vmatprep.subr.mxu0 0.0
        %847 = vmatpush2.msra.mxu0 0.0
        %848 = vmatprep.subr.mxu0 0.0
        %849 = vmatpush2.msra.mxu0 0.0
        %850 = vmatprep.subr.mxu0 0.0
        %851 = vmatpush2.msra.mxu0 0.0
        %852 = vmatprep.subr.mxu0 0.0
        %853 = vmatpush2.msra.mxu0 0.0
        %854 = vmatprep.subr.mxu0 0.0
        %855 = vmatpush2.msra.mxu0 0.0
        %856 = vmatprep.subr.mxu0 0.0
        %857 = vmatpush2.msra.mxu0 0.0
        %858 = vmatprep.subr.mxu0 0.0
        %859 = vmatpush2.msra.mxu0 0.0
        %860 = vmatprep.subr.mxu0 0.0
        %861 = vmatpush2.msra.mxu0 0.0
        %862 = vmatprep.subr.mxu0 0.0
        %863 = vmatpush2.msra.mxu0 0.0
        %864 = vmatprep.subr.mxu0 0.0
        %865 = vmatpush2.msra.mxu0 0.0
        %866 = vmatprep.subr.mxu0 0.0
        %867 = vmatpush2.msra.mxu0 0.0
        %868 = vmatprep.subr.mxu0 0.0
        %869 = vmatpush2.msra.mxu0 0.0
        %870 = vmatprep.subr.mxu0 0.0
        %871 = vmatpush2.msra.mxu0 0.0
        %872 = vmatprep.mubr.f32.mxu0 0.0
        %873 = vmatmul.mubr.f32.gmra.mxu0 %v803
        %v874 = vpop.f32.mrf.mxu0
        %v875 = vadd.f32 %v795, %v874
        %v876 = vpop.f32.mrf.mxu0
        %v877 = vadd.f32 %v795, %v876
        %878 = vmatprep.mubr.f32.mxu0 0.0
        %879 = vmatmul.mubr.f32.gmra.mxu0 %v806
        %v880 = vpop.f32.mrf.mxu0
        %v881 = vadd.f32 %v800, %v880
        %v882 = vpop.f32.mrf.mxu0
        %v883 = vadd.f32 %v800, %v882
        %884 = vdwg.mxu0
        %v885 = vsub.f32 0.0, %v875
        %v886 = vsub.f32 0.0, %v877
        %v887 = vsub.f32 0.0, %v881
        %v888 = vsub.f32 0.0, %v883
        %v889 = vmul.f32 %v885, 1.442695
        %v890 = vpow.pop %v889
        %v891 = vmul.f32 %v886, 1.442695
        %v892 = vpow.pop %v891
        %v893 = vmul.f32 %v887, 1.442695
        %v894 = vpow.pop %v893
        %v895 = vmul.f32 %v888, 1.442695
        %v896 = vpow.pop %v895
        %v897 = vadd.f32 %v890, 1.0
        %v898 = vadd.f32 %v892, 1.0
        %v899 = vadd.f32 %v894, 1.0
        %v900 = vadd.f32 %v896, 1.0
        %v901 = vrcp.pop %v897
        %v902 = vrcp.pop %v898
        %v903 = vrcp.pop %v899
        %v904 = vrcp.pop %v900
        %v905 = vmul.f32 %v730, %v901
        %v906 = vmul.f32 %v732, %v902
        %v907 = vmul.f32 %v734, %v903
        %v908 = vmul.f32 %v736, %v904
        %909 = vst [vmem:[%s233] sm:$0xff] %v905
        %910 = vst [vmem:[%s233 + $0x8] sm:$0xff] %v906
        %911 = vst [vmem:[%s233 + $0x10] sm:$0xff] %v907
        %912 = vst [vmem:[%s233 + $0x18] sm:$0xff] %v908
        %v913 = vmul.f32 %v740, %v901
        %v914 = vmul.f32 %v742, %v902
        %v915 = vmul.f32 %v744, %v903
        %v916 = vmul.f32 %v746, %v904
        %917 = vst [vmem:[%s233 + $0x20] sm:$0xff] %v913
        %918 = vst [vmem:[%s233 + $0x28] sm:$0xff] %v914
        %919 = vst [vmem:[%s233 + $0x30] sm:$0xff] %v915
        %920 = vst [vmem:[%s233 + $0x38] sm:$0xff] %v916
        %p921 = scmp.lt.s32.totalorder %s15, 1
        %s922 = scalar_select %p921, %s15, 1
        %s923 = smul.addr %s922, 8
        %s924 = smul.addr %s923, 8
        %s925 = scalar_lea.vmem %s4, %s924
        // Predicated region
        $region63: #{hnet_upsample_block_forward.1} parent=57 // pred_check
          %p926 = pneg %p122
        $region64: #{hnet_upsample_block_forward.1} parent=57 // pred_check_branch
          %928 = sbr.rel (%p926) target = $region66
        $region65: #{hnet_upsample_block_forward.1} parent=57 // pred_region
          _
        $region66: #{hnet_upsample_block_forward.1} parent=57 // pred_fallthru
          _
      $region58: #{hnet_upsample_block_forward.1} parent=5 // pred_fallthru
        _
      %p929 = scmp.le.s32.totalorder 2, %s10
      // Predicated region
      $region67: #{hnet_upsample_block_forward.1} parent=5 // pred_check
        %p930 = pneg %p929
      $region68: #{hnet_upsample_block_forward.1} parent=5 // pred_check_branch
        %932 = sbr.rel (%p930) target = $region70
      $region69: #{hnet_upsample_block_forward.1} parent=5 // pred_region
        %s933 = ssub.s32 %s10, 2
        // Predicated region
        $region71: #{hnet_upsample_block_forward.1} parent=69 // pred_check
          %p934 = pneg %p128
        $region72: #{hnet_upsample_block_forward.1} parent=69 // pred_check_branch
          %936 = sbr.rel (%p934) target = $region74
        $region73: #{hnet_upsample_block_forward.1} parent=69 // pred_region
          %p937 = scmp.lt.s32.totalorder %s16, 1
          %s938 = scalar_select %p937, %s16, 1
          %s939 = smul.addr %s938, 8
          %s940 = smul.addr %s939, 8
          %s941 = scalar_lea.vmem %s4, %s940
        $region74: #{hnet_upsample_block_forward.1} parent=69 // pred_fallthru
          _
      $region70: #{hnet_upsample_block_forward.1} parent=5 // pred_fallthru
        _
    $region6: #{hnet_upsample_block_forward.1} parent=1 // loop_footer
      %s14 = sadd.s32 1, %s10
    $region7: #{hnet_upsample_block_forward.1} parent=1 // loop_footer_branch
      %9 = sbr.rel target = $region3
    $region8: #{hnet_upsample_block_forward.1} parent=1 // loop_exit
      _

</llo_original>
